<compile_context>
chip_gen: v5e
topology: v5e:2x2
jax: 0.10.0
libtpu: 0.0.40
codegen_flags: <defaults>
</compile_context>

<pallas_src>
import functools

import jax
import jax.numpy as jnp
from jax.experimental import pallas as pl
from jax.experimental.pallas import tpu as pltpu

IN_FEATURES = 512
OUT_FEATURES = 18
OUT_PAD = 128          # lane-dense padded output width
DROP_P = 0.25
MAX_TILE_B = 1024      # safe for v5e/v6e and v7x (64 MiB VMEM) with 2x buffering


def _round_up(x, m):
    return ((x + m - 1) // m) * m


def _actor_eval_kernel(x_ref, w_ref, b_ref, o_ref):
    """(TILE_B,512) bf16 @ (512,128) bf16 -> (TILE_B,128) f32, + bias."""
    o_ref[...] = (
        jnp.dot(x_ref[...], w_ref[...], preferred_element_type=jnp.float32)
        + b_ref[...]
    )


def _actor_train_kernel(x_ref, m_ref, w_ref, b_ref, o_ref, *, scale):
    """Inverted dropout (mask precomputed, {0,1}) fused with the Linear."""
    x = x_ref[...].astype(jnp.float32) * (m_ref[...].astype(jnp.float32) * scale)
    o_ref[...] = (
        jnp.dot(x.astype(jnp.bfloat16), w_ref[...],
                preferred_element_type=jnp.float32)
        + b_ref[...]
    )


def prepare_params(weight, bias):
    """Hoisted, one-time param prep.

    weight: [18, 512] f32 (torch layout)  ->  w_pad: [512, 128] bf16
    bias:   [18] f32                      ->  b_pad: [1, 128]   f32
    """
    w_pad = jnp.zeros((IN_FEATURES, OUT_PAD), jnp.bfloat16)
    w_pad = w_pad.at[:, :OUT_FEATURES].set(weight.T.astype(jnp.bfloat16))
    b_pad = jnp.zeros((1, OUT_PAD), jnp.float32)
    b_pad = b_pad.at[:, :OUT_FEATURES].set(bias.astype(jnp.float32))
    return w_pad, b_pad


def actor_forward(phi, w_pad, b_pad, *, training=False, rng_key=None):
    """phi: [B, 512] (f32 or bf16); w_pad/b_pad from prepare_params.

    Returns [B, 18] f32.
    """
    B = phi.shape[0]
    tile_b = min(MAX_TILE_B, _round_up(B, 8))
    Bp = _round_up(B, tile_b)

    x = phi.astype(jnp.bfloat16)
    if Bp != B:
        x = jnp.pad(x, ((0, Bp - B), (0, 0)))

    grid = (Bp // tile_b,)
    x_spec = pl.BlockSpec((tile_b, IN_FEATURES), lambda i: (i, 0))
    w_spec = pl.BlockSpec((IN_FEATURES, OUT_PAD), lambda i: (0, 0))
    b_spec = pl.BlockSpec((1, OUT_PAD), lambda i: (0, 0))
    o_spec = pl.BlockSpec((tile_b, OUT_PAD), lambda i: (i, 0))

    if training:
        if rng_key is None:
            rng_key = jax.random.PRNGKey(0)
        # Keep-mask generated with the JAX RNG (runtime key -> no retrace per seed).
        keep = jax.random.bernoulli(rng_key, 1.0 - DROP_P, (Bp, IN_FEATURES))
        mask = keep.astype(jnp.bfloat16)
        kernel = functools.partial(_actor_train_kernel,
                                   scale=float(1.0 / (1.0 - DROP_P)))
        in_specs = [x_spec, x_spec, w_spec, b_spec]
        args = (x, mask, w_pad, b_pad)
    else:
        kernel = _actor_eval_kernel
        in_specs = [x_spec, w_spec, b_spec]
        args = (x, w_pad, b_pad)

    out_pad = pl.pallas_call(
        kernel,
        out_shape=jax.ShapeDtypeStruct((Bp, OUT_PAD), jnp.float32),
        grid=grid,
        in_specs=in_specs,
        out_specs=o_spec,
        compiler_params=pltpu.CompilerParams(
            dimension_semantics=("parallel",)
        ),
    )(*args)

    return out_pad[:B, :OUT_FEATURES]


def init_params(key):
    """Deterministic init mimicking torch.nn.Linear default (U[-k, k], k=1/sqrt(in))."""
    kw, kb = jax.random.split(key)
    bound = 1.0 / jnp.sqrt(jnp.float32(IN_FEATURES))
    weight = jax.random.uniform(
        kw, (OUT_FEATURES, IN_FEATURES), jnp.float32, -bound, bound
    )
    bias = jax.random.uniform(kb, (OUT_FEATURES,), jnp.float32, -bound, bound)
    return weight, bias


if __name__ == "__main__":
    key = jax.random.PRNGKey(0)
    k_phi, k_params, k_drop = jax.random.split(key, 3)

    B = 8  # small batch
    phi = jax.random.normal(k_phi, (B, IN_FEATURES), jnp.float32)
    weight, bias = init_params(k_params)
    w_pad, b_pad = prepare_params(weight, bias)

    # Eval-mode forward (dropout = identity) — deterministic.
    out = actor_forward(phi, w_pad, b_pad, training=False)
    out = jax.block_until_ready(out)
    assert out.shape == (B, OUT_FEATURES)

    # Reference computed on the same bf16-cast inputs (kernel uses bf16 MXU
    # inputs with f32 accumulation).
    phi_bf = phi.astype(jnp.bfloat16).astype(jnp.float32)
    w_bf = weight.T.astype(jnp.bfloat16).astype(jnp.float32)
    ref = phi_bf @ w_bf + bias
    assert jnp.allclose(out, ref, atol=2e-3, rtol=2e-3), "mismatch vs reference"

    # Exercise the training-mode (fused dropout) path as well.
    out_train = actor_forward(phi, w_pad, b_pad, training=True, rng_key=k_drop)
    out_train = jax.block_until_ready(out_train)
    assert out_train.shape == (B, OUT_FEATURES)
    assert bool(jnp.all(jnp.isfinite(out_train)))

    print("KERNEL_OK")
</pallas_src>

<mosaic_0001>
module attributes {stable_mosaic.version = 11 : i64} {
  func.func @_actor_eval_kernel(%arg0: i32, %arg1: memref<8x512xbf16, #tpu.memory_space<vmem>>, %arg2: memref<512x128xbf16, #tpu.memory_space<vmem>>, %arg3: memref<1x128xf32, #tpu.memory_space<vmem>>, %arg4: memref<8x128xf32, #tpu.memory_space<vmem>>) attributes {dimension_semantics = [#tpu.dimension_semantics<parallel>], iteration_bounds = array<i64: 1>, scalar_prefetch = 0 : i64, scratch_operands = 0 : i64, tpu.core_type = #tpu.core_type<tc>, window_params = [{transform_indices = @transform_0, window_bounds = array<i64: 8, 512>}, {pipeline_mode = #tpu.pipeline_mode<synchronous>, transform_indices = @transform_1, window_bounds = array<i64: 512, 128>}, {pipeline_mode = #tpu.pipeline_mode<synchronous>, transform_indices = @transform_2, window_bounds = array<i64: 1, 128>}, {transform_indices = @transform_3, window_bounds = array<i64: 8, 128>}]} {
    %c0 = arith.constant 0 : index
    %c0_0 = arith.constant 0 : index
    %0 = vector.load %arg1[%c0, %c0_0] : memref<8x512xbf16, #tpu.memory_space<vmem>>, vector<8x512xbf16>
    %c0_1 = arith.constant 0 : index
    %c0_2 = arith.constant 0 : index
    %1 = vector.load %arg2[%c0_1, %c0_2] : memref<512x128xbf16, #tpu.memory_space<vmem>>, vector<512x128xbf16>
    %cst = arith.constant dense<0.000000e+00> : vector<8x128xf32>
    %2 = tpu.matmul %0, %1, %cst {dimension_numbers = #tpu.dot_dimension_numbers<[1], [0], [0], [1], [0, 0, 1, 1], [], []>} : vector<8x512xbf16>, vector<512x128xbf16>, vector<8x128xf32> -> vector<8x128xf32>
    %c0_3 = arith.constant 0 : index
    %c0_4 = arith.constant 0 : index
    %3 = vector.load %arg3[%c0_3, %c0_4] : memref<1x128xf32, #tpu.memory_space<vmem>>, vector<1x128xf32>
    %4 = vector.broadcast %3 : vector<1x128xf32> to vector<8x128xf32>
    %5 = arith.addf %2, %4 : vector<8x128xf32>
    %c0_5 = arith.constant 0 : index
    %c0_6 = arith.constant 0 : index
    %6 = vector.load %arg4[%c0_5, %c0_6] : memref<8x128xf32, #tpu.memory_space<vmem>>, vector<8x128xf32>
    tpu.vector_store %arg4[%c0_5, %c0_6], %5 {strides = array<i32>} : memref<8x128xf32, #tpu.memory_space<vmem>>, vector<8x128xf32>,
    return
  }
  func.func @transform_0(%arg0: i32) -> (i32, i32) {
    %c0_i32 = arith.constant 0 : i32
    %c0_i32_0 = arith.constant 0 : i32
    return %arg0, %c0_i32 : i32, i32
  }
  func.func @transform_1(%arg0: i32) -> (i32, i32) {
    %c0_i32 = arith.constant 0 : i32
    %c0_i32_0 = arith.constant 0 : i32
    %c0_i32_1 = arith.constant 0 : i32
    return %c0_i32, %c0_i32_0 : i32, i32
  }
  func.func @transform_2(%arg0: i32) -> (i32, i32) {
    %c0_i32 = arith.constant 0 : i32
    %c0_i32_0 = arith.constant 0 : i32
    %c0_i32_1 = arith.constant 0 : i32
    return %c0_i32, %c0_i32_0 : i32, i32
  }
  func.func @transform_3(%arg0: i32) -> (i32, i32) {
    %c0_i32 = arith.constant 0 : i32
    %c0_i32_0 = arith.constant 0 : i32
    return %arg0, %c0_i32 : i32, i32
  }
}

</mosaic_0001>

<llo_original>
// kernel: tpu_custom_call.1
$region0: #{tpu_custom_call.1}
  #allocation0 [shape = 'u32[]', space=smem, size = 0x4, offset = 0x4, fixed_abs, tag = 'smem constant byte address 0x4 - core index']
  #allocation1 [shape = 'u32[72,128]{1,0:T(1,128)}', space=vmem, size = 0x9000, scoped, tag = 'internal scratch']
  %s0 = inlined_call_operand.hbm [shape: bf16[8,512], index: 0, kind: input, shape index: {}]
  %s1 = inlined_call_operand.hbm [shape: bf16[512,128], index: 1, kind: input, shape index: {}]
  %s2 = inlined_call_operand.vmem [shape: f32[1,128], index: 2, kind: input, shape index: {}]
  %s3 = inlined_call_operand.hbm [shape: f32[8,128], index: 3, kind: output, shape index: {}]
  %s4 = sld [smem:[#allocation0]]
  $region30: #{tpu_custom_call.1} parent=0
    _
  %s6 = ssub.s32 1, %s4
  %s7 = scalar_select 0, %s6, %s4
  $region1: #{tpu_custom_call.1} parent=0
    #allocation2 [shape = 'u8[8192]{0}', space=vmem, size = 0x2000, scoped, tag = 'input window, operand 0, single buffered']
    #allocation3 [shape = 's32[1]{0}', space=sflag, size = 0x4, scoped, tag = 'scoped memory for tpu_custom_call.1']
    #allocation4 [shape = 's32[1]{0}', space=sflag, size = 0x4, scoped, tag = 'scoped memory for tpu_custom_call.1']
    #allocation5 [shape = 'u8[131072]{0}', space=vmem, size = 0x20000, scoped, tag = 'input window, operand 1, single buffered']
    #allocation6 [shape = 's32[1]{0}', space=sflag, size = 0x4, scoped, tag = 'scoped memory for tpu_custom_call.1']
    #allocation7 [shape = 'u8[4096]{0}', space=vmem, size = 0x1000, scoped, tag = 'output window, operand 0, single buffered']
    %8 = vsyncpa [#allocation3], 0
    %9 = vsyncpa [#allocation6], 0
    %10 = vsyncpa [#allocation4], 0
    // Predicated region
    $region2: #{tpu_custom_call.1} parent=1 // pred_check
      _
    $region3: #{tpu_custom_call.1} parent=1 // pred_check_branch
      %12 = sbr.rel (0) target = $region5
    $region4: #{tpu_custom_call.1} parent=1 // pred_region
      %14 = vsyncadd [#allocation3], 0
      %s16 = sshll.u32 %s0, 4
      %s17 = int_to_ptr.hbm [resolvable:$true] %s16
      %s18 = sshll.u32 [#allocation2], 4
      %s19 = int_to_ptr.vmem [resolvable:$true] %s18
      %21 = dma.hbm_to_vmem [thread:$0]  %s17, 256, %s19, [#allocation3]
    $region5: #{tpu_custom_call.1} parent=1 // pred_fallthru
      _
    // Predicated region
    $region6: #{tpu_custom_call.1} parent=1 // pred_check
      _
    $region7: #{tpu_custom_call.1} parent=1 // pred_check_branch
      %23 = sbr.rel (0) target = $region9
    $region8: #{tpu_custom_call.1} parent=1 // pred_region
      %25 = vsyncadd [#allocation6], 0
      %s26 = sshll.u32 %s1, 4
      %s27 = int_to_ptr.hbm [resolvable:$true] %s26
      %s28 = sshll.u32 [#allocation5], 4
      %s29 = int_to_ptr.vmem [resolvable:$true] %s28
      %34 = dma.hbm_to_vmem [thread:$0]  %s27, 4096, %s29, [#allocation6], 64, 64, 4
    $region9: #{tpu_custom_call.1} parent=1 // pred_fallthru
      _
    // Predicated region
    $region10: #{tpu_custom_call.1} parent=1 // pred_check
      _
    $region11: #{tpu_custom_call.1} parent=1 // pred_check_branch
      %36 = sbr.rel (0) target = $region13
    $region12: #{tpu_custom_call.1} parent=1 // pred_region
      _
    $region13: #{tpu_custom_call.1} parent=1 // pred_fallthru
      _
    // Predicated region
    $region14: #{tpu_custom_call.1} parent=1 // pred_check
      _
    $region15: #{tpu_custom_call.1} parent=1 // pred_check_branch
      %38 = sbr.rel (0) target = $region17
    $region16: #{tpu_custom_call.1} parent=1 // pred_region
      %40 = dma.done [#allocation3], 256
    $region17: #{tpu_custom_call.1} parent=1 // pred_fallthru
      _
    // Predicated region
    $region18: #{tpu_custom_call.1} parent=1 // pred_check
      _
    $region19: #{tpu_custom_call.1} parent=1 // pred_check_branch
      %42 = sbr.rel (0) target = $region21
    $region20: #{tpu_custom_call.1} parent=1 // pred_region
      %44 = dma.done [#allocation6], 4096
    $region21: #{tpu_custom_call.1} parent=1 // pred_fallthru
      _
    %v45 = vld [vmem:[#allocation2] sm:$0xff]
    %v46 = vld [vmem:[#allocation2 + $0x8] sm:$0xff]
    %v47 = vld [vmem:[#allocation5] sm:$0xf]
    %v48 = vld [vmem:[#allocation5 + $0x4] sm:$0xf]
    %v49 = vld [vmem:[#allocation5 + $0x8] sm:$0xf]
    %v50 = vld [vmem:[#allocation5 + $0xc] sm:$0xf]
    %v51 = vld [vmem:[#allocation5 + $0x10] sm:$0xf]
    %v52 = vld [vmem:[#allocation5 + $0x14] sm:$0xf]
    %v53 = vld [vmem:[#allocation5 + $0x18] sm:$0xf]
    %v54 = vld [vmem:[#allocation5 + $0x1c] sm:$0xf]
    %v55 = vld [vmem:[#allocation5 + $0x20] sm:$0xf]
    %v56 = vld [vmem:[#allocation5 + $0x24] sm:$0xf]
    %v57 = vld [vmem:[#allocation5 + $0x28] sm:$0xf]
    %v58 = vld [vmem:[#allocation5 + $0x2c] sm:$0xf]
    %v59 = vld [vmem:[#allocation5 + $0x30] sm:$0xf]
    %v60 = vld [vmem:[#allocation5 + $0x34] sm:$0xf]
    %v61 = vld [vmem:[#allocation5 + $0x38] sm:$0xf]
    %v62 = vld [vmem:[#allocation5 + $0x3c] sm:$0xf]
    %v63 = vld [vmem:[#allocation5 + $0x40] sm:$0xf]
    %v64 = vld [vmem:[#allocation5 + $0x44] sm:$0xf]
    %v65 = vld [vmem:[#allocation5 + $0x48] sm:$0xf]
    %v66 = vld [vmem:[#allocation5 + $0x4c] sm:$0xf]
    %v67 = vld [vmem:[#allocation5 + $0x50] sm:$0xf]
    %v68 = vld [vmem:[#allocation5 + $0x54] sm:$0xf]
    %v69 = vld [vmem:[#allocation5 + $0x58] sm:$0xf]
    %v70 = vld [vmem:[#allocation5 + $0x5c] sm:$0xf]
    %v71 = vld [vmem:[#allocation5 + $0x60] sm:$0xf]
    %v72 = vld [vmem:[#allocation5 + $0x64] sm:$0xf]
    %v73 = vld [vmem:[#allocation5 + $0x68] sm:$0xf]
    %v74 = vld [vmem:[#allocation5 + $0x6c] sm:$0xf]
    %v75 = vld [vmem:[#allocation5 + $0x70] sm:$0xf]
    %v76 = vld [vmem:[#allocation5 + $0x74] sm:$0xf]
    %v77 = vld [vmem:[#allocation5 + $0x78] sm:$0xf]
    %v78 = vld [vmem:[#allocation5 + $0x7c] sm:$0xf]
    %v79 = vld [vmem:[#allocation5 + $0x80] sm:$0xf]
    %v80 = vld [vmem:[#allocation5 + $0x84] sm:$0xf]
    %v81 = vld [vmem:[#allocation5 + $0x88] sm:$0xf]
    %v82 = vld [vmem:[#allocation5 + $0x8c] sm:$0xf]
    %v83 = vld [vmem:[#allocation5 + $0x90] sm:$0xf]
    %v84 = vld [vmem:[#allocation5 + $0x94] sm:$0xf]
    %v85 = vld [vmem:[#allocation5 + $0x98] sm:$0xf]
    %v86 = vld [vmem:[#allocation5 + $0x9c] sm:$0xf]
    %v87 = vld [vmem:[#allocation5 + $0xa0] sm:$0xf]
    %v88 = vld [vmem:[#allocation5 + $0xa4] sm:$0xf]
    %v89 = vld [vmem:[#allocation5 + $0xa8] sm:$0xf]
    %v90 = vld [vmem:[#allocation5 + $0xac] sm:$0xf]
    %v91 = vld [vmem:[#allocation5 + $0xb0] sm:$0xf]
    %v92 = vld [vmem:[#allocation5 + $0xb4] sm:$0xf]
    %v93 = vld [vmem:[#allocation5 + $0xb8] sm:$0xf]
    %v94 = vld [vmem:[#allocation5 + $0xbc] sm:$0xf]
    %v95 = vld [vmem:[#allocation5 + $0xc0] sm:$0xf]
    %v96 = vld [vmem:[#allocation5 + $0xc4] sm:$0xf]
    %v97 = vld [vmem:[#allocation5 + $0xc8] sm:$0xf]
    %v98 = vld [vmem:[#allocation5 + $0xcc] sm:$0xf]
    %v99 = vld [vmem:[#allocation5 + $0xd0] sm:$0xf]
    %v100 = vld [vmem:[#allocation5 + $0xd4] sm:$0xf]
    %v101 = vld [vmem:[#allocation5 + $0xd8] sm:$0xf]
    %v102 = vld [vmem:[#allocation5 + $0xdc] sm:$0xf]
    %v103 = vld [vmem:[#allocation5 + $0xe0] sm:$0xf]
    %v104 = vld [vmem:[#allocation5 + $0xe4] sm:$0xf]
    %v105 = vld [vmem:[#allocation5 + $0xe8] sm:$0xf]
    %v106 = vld [vmem:[#allocation5 + $0xec] sm:$0xf]
    %v107 = vld [vmem:[#allocation5 + $0xf0] sm:$0xf]
    %v108 = vld [vmem:[#allocation5 + $0xf4] sm:$0xf]
    %v109 = vld [vmem:[#allocation5 + $0xf8] sm:$0xf]
    %v110 = vld [vmem:[#allocation5 + $0xfc] sm:$0xf]
    %v111 = vld [vmem:[%s2] sm:$0x1]
    %v113 = vperm.slane %v111, 0
    %v117 = vunpack.c.l.b16 %v45
    %v118 = vunpack.c.h.b16 %v45
    %v119 = vunpack.c.l.b16 %v46
    %v120 = vunpack.c.h.b16 %v46
    %v121 = vpack.c.b16 %v117, %v117
    %v122 = vpack.c.b16 %v118, %v118
    %v123 = vpack.c.b16 %v119, %v119
    %v124 = vpack.c.b16 %v120, %v120
    %v193 = vunpack.c.l.b16 %v47
    %v194 = vunpack.c.l.b16 %v48
    %v195 = vunpack.c.l.b16 %v49
    %v196 = vunpack.c.l.b16 %v50
    %v197 = vunpack.c.l.b16 %v51
    %v198 = vunpack.c.l.b16 %v52
    %v199 = vunpack.c.l.b16 %v53
    %v200 = vunpack.c.l.b16 %v54
    %v201 = vunpack.c.l.b16 %v55
    %v202 = vunpack.c.l.b16 %v56
    %v203 = vunpack.c.l.b16 %v57
    %v204 = vunpack.c.l.b16 %v58
    %v205 = vunpack.c.l.b16 %v59
    %v206 = vunpack.c.l.b16 %v60
    %v207 = vunpack.c.l.b16 %v61
    %v208 = vunpack.c.l.b16 %v62
    %v209 = vunpack.c.l.b16 %v63
    %v210 = vunpack.c.l.b16 %v64
    %v211 = vunpack.c.l.b16 %v65
    %v212 = vunpack.c.l.b16 %v66
    %v213 = vunpack.c.l.b16 %v67
    %v214 = vunpack.c.l.b16 %v68
    %v215 = vunpack.c.l.b16 %v69
    %v216 = vunpack.c.l.b16 %v70
    %v217 = vunpack.c.l.b16 %v71
    %v218 = vunpack.c.l.b16 %v72
    %v219 = vunpack.c.l.b16 %v73
    %v220 = vunpack.c.l.b16 %v74
    %v221 = vunpack.c.l.b16 %v75
    %v222 = vunpack.c.l.b16 %v76
    %v223 = vunpack.c.l.b16 %v77
    %v224 = vunpack.c.l.b16 %v78
    %v225 = vunpack.c.l.b16 %v79
    %v226 = vunpack.c.l.b16 %v80
    %v227 = vunpack.c.l.b16 %v81
    %v228 = vunpack.c.l.b16 %v82
    %v229 = vunpack.c.l.b16 %v83
    %v230 = vunpack.c.l.b16 %v84
    %v231 = vunpack.c.l.b16 %v85
    %v232 = vunpack.c.l.b16 %v86
    %v233 = vunpack.c.l.b16 %v87
    %v234 = vunpack.c.l.b16 %v88
    %v235 = vunpack.c.l.b16 %v89
    %v236 = vunpack.c.l.b16 %v90
    %v237 = vunpack.c.l.b16 %v91
    %v238 = vunpack.c.l.b16 %v92
    %v239 = vunpack.c.l.b16 %v93
    %v240 = vunpack.c.l.b16 %v94
    %v241 = vunpack.c.l.b16 %v95
    %v242 = vunpack.c.l.b16 %v96
    %v243 = vunpack.c.l.b16 %v97
    %v244 = vunpack.c.l.b16 %v98
    %v245 = vunpack.c.l.b16 %v99
    %v246 = vunpack.c.l.b16 %v100
    %v247 = vunpack.c.l.b16 %v101
    %v248 = vunpack.c.l.b16 %v102
    %v249 = vunpack.c.l.b16 %v103
    %v250 = vunpack.c.l.b16 %v104
    %v251 = vunpack.c.l.b16 %v105
    %v252 = vunpack.c.l.b16 %v106
    %v253 = vunpack.c.l.b16 %v107
    %v254 = vunpack.c.l.b16 %v108
    %v255 = vunpack.c.l.b16 %v109
    %v256 = vunpack.c.l.b16 %v110
    %v257 = vpack.c.b16 %v194, %v193
    %v258 = vpack.c.b16 %v196, %v195
    %v259 = vpack.c.b16 %v198, %v197
    %v260 = vpack.c.b16 %v200, %v199
    %v261 = vpack.c.b16 %v202, %v201
    %v262 = vpack.c.b16 %v204, %v203
    %v263 = vpack.c.b16 %v206, %v205
    %v264 = vpack.c.b16 %v208, %v207
    %v265 = vpack.c.b16 %v210, %v209
    %v266 = vpack.c.b16 %v212, %v211
    %v267 = vpack.c.b16 %v214, %v213
    %v268 = vpack.c.b16 %v216, %v215
    %v269 = vpack.c.b16 %v218, %v217
    %v270 = vpack.c.b16 %v220, %v219
    %v271 = vpack.c.b16 %v222, %v221
    %v272 = vpack.c.b16 %v224, %v223
    %v273 = vpack.c.b16 %v226, %v225
    %v274 = vpack.c.b16 %v228, %v227
    %v275 = vpack.c.b16 %v230, %v229
    %v276 = vpack.c.b16 %v232, %v231
    %v277 = vpack.c.b16 %v234, %v233
    %v278 = vpack.c.b16 %v236, %v235
    %v279 = vpack.c.b16 %v238, %v237
    %v280 = vpack.c.b16 %v240, %v239
    %v281 = vpack.c.b16 %v242, %v241
    %v282 = vpack.c.b16 %v244, %v243
    %v283 = vpack.c.b16 %v246, %v245
    %v284 = vpack.c.b16 %v248, %v247
    %v285 = vpack.c.b16 %v250, %v249
    %v286 = vpack.c.b16 %v252, %v251
    %v287 = vpack.c.b16 %v254, %v253
    %v288 = vpack.c.b16 %v256, %v255
    %321 = vmatpush.bf16.msra.mxu0 %v264
    %322 = vmatpush.bf16.msra.mxu0 %v263
    %323 = vmatpush.bf16.msra.mxu0 %v262
    %324 = vmatpush.bf16.msra.mxu0 %v261
    %325 = vmatpush.bf16.msra.mxu0 %v260
    %326 = vmatpush.bf16.msra.mxu0 %v259
    %327 = vmatpush.bf16.msra.mxu0 %v258
    %328 = vmatpush.bf16.msra.mxu0 %v257
    %329 = vmatmul.bf16.gmra.mxu0 %v121
    %v330 = vpop.f32.mrf.mxu0
    %v331 = vadd.f32 %v113, %v330
    %v332 = vpop.f32.mrf.mxu0
    %333 = vdwg.mxu0
    %334 = vmatpush.bf16.msra.mxu0 %v272
    %335 = vmatpush.bf16.msra.mxu0 %v271
    %336 = vmatpush.bf16.msra.mxu0 %v270
    %337 = vmatpush.bf16.msra.mxu0 %v269
    %338 = vmatpush.bf16.msra.mxu0 %v268
    %339 = vmatpush.bf16.msra.mxu0 %v267
    %340 = vmatpush.bf16.msra.mxu0 %v266
    %341 = vmatpush.bf16.msra.mxu0 %v265
    %342 = vmatmul.bf16.gmra.mxu0 %v122
    %v343 = vpop.f32.mrf.mxu0
    %v344 = vadd.f32 %v331, %v343
    %v345 = vpop.f32.mrf.mxu0
    %346 = vdwg.mxu0
    %347 = vmatpush.bf16.msra.mxu0 %v280
    %348 = vmatpush.bf16.msra.mxu0 %v279
    %349 = vmatpush.bf16.msra.mxu0 %v278
    %350 = vmatpush.bf16.msra.mxu0 %v277
    %351 = vmatpush.bf16.msra.mxu0 %v276
    %352 = vmatpush.bf16.msra.mxu0 %v275
    %353 = vmatpush.bf16.msra.mxu0 %v274
    %354 = vmatpush.bf16.msra.mxu0 %v273
    %355 = vmatmul.bf16.gmra.mxu0 %v123
    %v356 = vpop.f32.mrf.mxu0
    %v357 = vadd.f32 %v344, %v356
    %v358 = vpop.f32.mrf.mxu0
    %359 = vdwg.mxu0
    %360 = vmatpush.bf16.msra.mxu0 %v288
    %361 = vmatpush.bf16.msra.mxu0 %v287
    %362 = vmatpush.bf16.msra.mxu0 %v286
    %363 = vmatpush.bf16.msra.mxu0 %v285
    %364 = vmatpush.bf16.msra.mxu0 %v284
    %365 = vmatpush.bf16.msra.mxu0 %v283
    %366 = vmatpush.bf16.msra.mxu0 %v282
    %367 = vmatpush.bf16.msra.mxu0 %v281
    %368 = vmatmul.bf16.gmra.mxu0 %v124
    %v369 = vpop.f32.mrf.mxu0
    %v370 = vadd.f32 %v357, %v369
    %v371 = vpop.f32.mrf.mxu0
    %372 = vdwg.mxu0
    %373 = vst [vmem:[#allocation7] sm:$0xff] %v370
    // Predicated region
    $region22: #{tpu_custom_call.1} parent=1 // pred_check
      _
    $region23: #{tpu_custom_call.1} parent=1 // pred_check_branch
      %375 = sbr.rel (0) target = $region25
    $region24: #{tpu_custom_call.1} parent=1 // pred_region
      %377 = vsyncadd [#allocation4], 0
      %s379 = sshll.u32 [#allocation7], 4
      %s380 = int_to_ptr.vmem [resolvable:$true] %s379
      %s381 = sshll.u32 %s3, 4
      %s382 = int_to_ptr.hbm [resolvable:$true] %s381
      %384 = dma.vmem_to_hbm [thread:$0]  %s380, 128, %s382, [#allocation4]
    $region25: #{tpu_custom_call.1} parent=1 // pred_fallthru
      _
    // Predicated region
    $region26: #{tpu_custom_call.1} parent=1 // pred_check
      _
    $region27: #{tpu_custom_call.1} parent=1 // pred_check_branch
      %386 = sbr.rel (0) target = $region29
    $region28: #{tpu_custom_call.1} parent=1 // pred_region
      %388 = dma.done [#allocation4], 128
    $region29: #{tpu_custom_call.1} parent=1 // pred_fallthru
      _
    %389 = vsyncpa [#allocation3], 1
    %390 = vsyncpa [#allocation6], 1
    %391 = vsyncpa [#allocation4], 1

</llo_original>
